<compile_context>
chip_gen: v6e
topology: v6e:2x2x1
jax: 0.10.0
libtpu: 0.0.40
codegen_flags: <defaults>
</compile_context>

<pallas_src>
import jax
import jax.numpy as jnp
from jax.experimental import pallas as pl
from jax.experimental.pallas import tpu as pltpu

NEG_K = 0.01
LANE = 128
# Candidate slab widths (multiples of 128); widest that exactly tiles the
# array wins -> fully lane-dense, unmasked vst and few, large DMA descriptors.
_WIDTH_CANDIDATES = (4096, 2048, 1024, 512, 256, 128)
# Minimum grid steps to aim for when the array is big enough (>= 4 per v7x TC).
_MIN_STEPS = 8


def _reference(x):
    """Literal PyTorch formula (used for the XLA fallback path and testing)."""
    neg_k = jnp.asarray(NEG_K, dtype=x.dtype)
    y = jnp.where(x >= 0, x, x * neg_k)
    y = jnp.clip(y, jnp.asarray(0.0, x.dtype), jnp.asarray(6.0, x.dtype))
    return y * jnp.asarray(1.0 / 6.0, x.dtype)


def _scaled_leaky_relu6_kernel(x_ref, o_ref):
    x = x_ref[...]
    # NEG_K > 0 and clamp(min=0) make the leaky branch dead code: the result
    # is exactly relu6(x) / 6 (bit-identical to the reference formula).
    y = jnp.clip(x, jnp.asarray(0.0, x.dtype), jnp.asarray(6.0, x.dtype))
    o_ref[...] = y * jnp.asarray(1.0 / 6.0, x.dtype)


def _round_up(a, b):
    return ((a + b - 1) // b) * b


def _sublane(dtype):
    # Minimum packed tile rows: 8 for 4-byte, 16 for 2-byte, 32 for 1-byte.
    itemsize = jnp.dtype(dtype).itemsize
    return max(8, (8 * 4) // itemsize)


def _tile_config():
    """Returns (target_tile_bytes, vmem_limit_bytes) for this TPU generation."""
    tile_bytes, vmem_limit = 4 << 20, 32 << 20   # v5e / v6e (128 MiB VMEM) knee
    try:
        info = pltpu.get_tpu_info()
        vmem_cap = getattr(info, "vmem_capacity_bytes", None)
        if vmem_cap is not None and vmem_cap <= (64 << 20):
            # v7x-style TC: 64 MiB VMEM but ~3.2 TB/s -> bigger tiles amortize
            # the ~0.35us/step cost; 2 in + 2 out buffers x 8 MiB = 32 MiB live.
            tile_bytes, vmem_limit = 8 << 20, 48 << 20
    except Exception:
        pass
    return tile_bytes, vmem_limit


def scaled_leaky_relu6(x, donate_input=False):
    """Applies ScaledLeakyRelu6 elementwise to an array of any shape."""
    orig_shape = x.shape
    dtype = x.dtype
    n = x.size
    if n == 0:
        return x

    itemsize = jnp.dtype(dtype).itemsize
    sublane = _sublane(dtype)
    base = sublane * LANE                      # minimal TPU tile, in elements

    if n % base != 0:
        # Unaligned: a slice + kernel + concatenate would cost ~3x the HBM
        # traffic of a single fused XLA pass, so just let XLA do it.
        return _reference(x)

    # ---- aligned bulk path: everything flows through the Pallas kernel ----
    target_tile_bytes, vmem_limit_bytes = _tile_config()

    # Widest lane-dense slab width that exactly tiles the array.
    width = LANE
    for cand in _WIDTH_CANDIDATES:
        if n % (sublane * cand) == 0:
            width = cand
            break
    rows = n // width                          # guaranteed multiple of sublane

    # Block rows: <= ~target_tile_bytes per tile, a multiple of sublane, and
    # aim for >= _MIN_STEPS grid steps so each v7x TC gets a pipelined stream.
    max_br = max(
        sublane,
        (target_tile_bytes // (width * itemsize)) // sublane * sublane,
    )
    target_br = _round_up(pl.cdiv(rows, _MIN_STEPS), sublane)
    br = max(sublane, min(max_br, target_br, rows))
    steps = pl.cdiv(rows, br)
    if steps > 1 and steps % 2 == 1:
        # Nudge to an even step count so the two v7x TensorCores stay balanced.
        br_even = max(sublane, _round_up(pl.cdiv(rows, steps + 1), sublane))
        if pl.cdiv(rows, br_even) % 2 == 0:
            br = br_even
            steps = pl.cdiv(rows, br)
    grid = (steps,)                            # partial last block is masked

    x2d = x.reshape(rows, width)

    call_kwargs = {}
    if donate_input:
        # Output has identical shape/dtype: let it reuse the input HBM buffer
        # when the caller donates x (avoids a second n-byte allocation).
        call_kwargs["input_output_aliases"] = {0: 0}

    out2d = pl.pallas_call(
        _scaled_leaky_relu6_kernel,
        out_shape=jax.ShapeDtypeStruct((rows, width), dtype),
        grid=grid,
        in_specs=[pl.BlockSpec((br, width), lambda i: (i, 0))],
        out_specs=pl.BlockSpec((br, width), lambda i: (i, 0)),
        compiler_params=pltpu.CompilerParams(
            dimension_semantics=("parallel",),
            vmem_limit_bytes=vmem_limit_bytes,
        ),
        cost_estimate=pl.CostEstimate(
            flops=2 * n,
            transcendentals=0,
            bytes_accessed=2 * n * itemsize,
        ),
        **call_kwargs,
    )(x2d)

    return out2d.reshape(orig_shape)


if __name__ == "__main__":
    key = jax.random.PRNGKey(0)
    # NCHW input consistent with a conv-style activation layer.
    x = jax.random.normal(key, (2, 4, 16, 16), dtype=jnp.float32) * 4.0

    out = jax.block_until_ready(scaled_leaky_relu6(x))
    ref = _reference(x)
    assert out.shape == x.shape and out.dtype == x.dtype
    assert jnp.allclose(out, ref, atol=1e-6, rtol=1e-6)

    # Non-aligned size: handled entirely by the fused XLA fallback path.
    x2 = jax.random.normal(jax.random.PRNGKey(1), (3, 17, 29), dtype=jnp.float32) * 4.0
    out2 = jax.block_until_ready(scaled_leaky_relu6(x2))
    assert jnp.allclose(out2, _reference(x2), atol=1e-6, rtol=1e-6)

    # bf16 streams natively with 16-row sublane packing (no upcast).
    x3 = (jax.random.normal(jax.random.PRNGKey(2), (2, 4, 16, 16)) * 4.0).astype(
        jnp.bfloat16
    )
    out3 = jax.block_until_ready(scaled_leaky_relu6(x3))
    assert out3.dtype == jnp.bfloat16
    assert jnp.allclose(
        out3.astype(jnp.float32),
        _reference(x3).astype(jnp.float32),
        atol=2e-2,
        rtol=2e-2,
    )

    print("KERNEL_OK")
</pallas_src>

<mosaic_0001>
module attributes {stable_mosaic.version = 11 : i64} {
  func.func @_scaled_leaky_relu6_kernel(%arg0: i32, %arg1: memref<8x256xf32, #tpu.memory_space<vmem>>, %arg2: memref<8x256xf32, #tpu.memory_space<vmem>>) attributes {dimension_semantics = [#tpu.dimension_semantics<parallel>], iteration_bounds = array<i64: 1>, scalar_prefetch = 0 : i64, scratch_operands = 0 : i64, tpu.core_type = #tpu.core_type<tc>, window_params = [{transform_indices = @transform_0, window_bounds = array<i64: 8, 256>}, {transform_indices = @transform_1, window_bounds = array<i64: 8, 256>}]} {
    %c0 = arith.constant 0 : index
    %c0_0 = arith.constant 0 : index
    %0 = vector.load %arg1[%c0, %c0_0] : memref<8x256xf32, #tpu.memory_space<vmem>>, vector<8x256xf32>
    %cst = arith.constant 0.000000e+00 : f32
    %cst_1 = arith.constant 6.000000e+00 : f32
    %1 = vector.broadcast %cst : f32 to vector<8x256xf32>
    %2 = arith.maximumf %1, %0 : vector<8x256xf32>
    %3 = vector.broadcast %cst_1 : f32 to vector<8x256xf32>
    %4 = arith.minimumf %3, %2 : vector<8x256xf32>
    %cst_2 = arith.constant 0.166666672 : f32
    %5 = vector.broadcast %cst_2 : f32 to vector<8x256xf32>
    %6 = arith.mulf %4, %5 : vector<8x256xf32>
    %c0_3 = arith.constant 0 : index
    %c0_4 = arith.constant 0 : index
    %7 = vector.load %arg2[%c0_3, %c0_4] : memref<8x256xf32, #tpu.memory_space<vmem>>, vector<8x256xf32>
    tpu.vector_store %arg2[%c0_3, %c0_4], %6 {strides = array<i32>} : memref<8x256xf32, #tpu.memory_space<vmem>>, vector<8x256xf32>,
    return
  }
  func.func @transform_0(%arg0: i32) -> (i32, i32) {
    %c0_i32 = arith.constant 0 : i32
    %c0_i32_0 = arith.constant 0 : i32
    return %arg0, %c0_i32 : i32, i32
  }
  func.func @transform_1(%arg0: i32) -> (i32, i32) {
    %c0_i32 = arith.constant 0 : i32
    %c0_i32_0 = arith.constant 0 : i32
    return %arg0, %c0_i32 : i32, i32
  }
}

</mosaic_0001>

<llo_original>
// kernel: tpu_custom_call.1
$region0: #{tpu_custom_call.1}
  #allocation0 [shape = 'u32[]', space=smem, size = 0x4, offset = 0x4, fixed_abs, tag = 'smem constant byte address 0x4 - core index']
  #allocation1 [shape = 'u32[144,128]{1,0:T(1,128)}', space=vmem, size = 0x12000, scoped, tag = 'internal scratch']
  %s0 = inlined_call_operand.hbm [shape: f32[8,256], index: 0, kind: input, shape index: {}]
  %s1 = inlined_call_operand.hbm [shape: f32[8,256], index: 1, kind: output, shape index: {}]
  %s2 = sld [smem:[#allocation0]]
  $region18: #{tpu_custom_call.1} parent=0
    _
  %s4 = ssub.s32 1, %s2
  %s5 = scalar_select 0, %s4, %s2
  $region1: #{tpu_custom_call.1} parent=0
    #allocation2 [shape = 'u8[8192]{0}', space=vmem, size = 0x2000, scoped, tag = 'input window, operand 0, single buffered']
    #allocation3 [shape = 's32[1]{0}', space=sflag, size = 0x4, scoped, tag = 'scoped memory for tpu_custom_call.1']
    #allocation4 [shape = 's32[1]{0}', space=sflag, size = 0x4, scoped, tag = 'scoped memory for tpu_custom_call.1']
    #allocation5 [shape = 'u8[8192]{0}', space=vmem, size = 0x2000, scoped, tag = 'output window, operand 0, single buffered']
    %6 = vsyncpa [#allocation3], 0
    %7 = vsyncpa [#allocation4], 0
    // Predicated region
    $region2: #{tpu_custom_call.1} parent=1 // pred_check
      _
    $region3: #{tpu_custom_call.1} parent=1 // pred_check_branch
      %9 = sbr.rel (0) target = $region5
    $region4: #{tpu_custom_call.1} parent=1 // pred_region
      %s11 = ssub.s32 256, 256
      %12 = vsyncadd [#allocation3], %s11
      %s14 = sshll.u32 [#allocation2], 4
      %s15 = int_to_ptr.vmem [resolvable:$true] %s14
      %17 = dma.hbm_to_vmem [thread:$0]  %s0, 256, %s15, [#allocation3]
    $region5: #{tpu_custom_call.1} parent=1 // pred_fallthru
      _
    // Predicated region
    $region6: #{tpu_custom_call.1} parent=1 // pred_check
      _
    $region7: #{tpu_custom_call.1} parent=1 // pred_check_branch
      %19 = sbr.rel (0) target = $region9
    $region8: #{tpu_custom_call.1} parent=1 // pred_region
      %20 = dma.done [#allocation3], 256
    $region9: #{tpu_custom_call.1} parent=1 // pred_fallthru
      _
    %v21 = vld [vmem:[#allocation2] sm:$0xff]
    %v22 = vld [vmem:[#allocation2 + $0x8] sm:$0xff]
    %v23 = vmax.f32 %v21, 0.0
    %v24 = vmax.f32 %v22, 0.0
    %v25 = vmin.f32 %v23, 6.0
    %v26 = vmin.f32 %v24, 6.0
    %v27 = vmul.f32 %v25, 0.16666667
    %v28 = vmul.f32 %v26, 0.16666667
    %29 = vst [vmem:[#allocation5] sm:$0xff] %v27
    %30 = vst [vmem:[#allocation5 + $0x8] sm:$0xff] %v28
    // Predicated region
    $region10: #{tpu_custom_call.1} parent=1 // pred_check
      _
    $region11: #{tpu_custom_call.1} parent=1 // pred_check_branch
      %32 = sbr.rel (0) target = $region13
    $region12: #{tpu_custom_call.1} parent=1 // pred_region
      %s34 = ssub.s32 256, 256
      %35 = vsyncadd [#allocation4], %s34
      %s37 = sshll.u32 [#allocation5], 4
      %s38 = int_to_ptr.vmem [resolvable:$true] %s37
      %40 = dma.vmem_to_hbm [thread:$0]  %s38, 256, %s1, [#allocation4]
    $region13: #{tpu_custom_call.1} parent=1 // pred_fallthru
      _
    // Predicated region
    $region14: #{tpu_custom_call.1} parent=1 // pred_check
      _
    $region15: #{tpu_custom_call.1} parent=1 // pred_check_branch
      %42 = sbr.rel (0) target = $region17
    $region16: #{tpu_custom_call.1} parent=1 // pred_region
      %43 = dma.done [#allocation4], 256
    $region17: #{tpu_custom_call.1} parent=1 // pred_fallthru
      _
    %44 = vsyncpa [#allocation3], 1
    %45 = vsyncpa [#allocation4], 1

</llo_original>
